<compile_context>
chip_gen: v7x
topology: tpu7x:2x2x1
jax: 0.10.0
libtpu: 0.0.40
codegen_flags: <defaults>
</compile_context>

<pallas_src>
import functools

import jax
import jax.numpy as jnp
from jax.experimental import pallas as pl
from jax.experimental.pallas import tpu as pltpu


def _round_up(x, m):
    return (x + m - 1) // m * m


# ---------------------------------------------------------------------------
# Kernel (one batch tile)
# ---------------------------------------------------------------------------
def _cnn_kernel(x_ref, wt_ref, b_ref, wfc_ref, bfc_ref, o_ref, *,
                seg_lens, hidden, out_dim):
    """x_ref:(tn,L)  wt_ref:(L,total)  b_ref:(1,total)
    wfc_ref:(1,n*H) if out_dim==1 else (n*H,out_dim)  bfc_ref:(1,out_dim)
    o_ref:(tn,out_dim)."""
    x = x_ref[...]                                              # (tn, L) f32

    # All 1-D convolutions as ONE lane-dense MXU matmul (Toeplitz weights).
    conv = jnp.dot(x, wt_ref[...], preferred_element_type=jnp.float32)
    act = jnp.maximum(conv + b_ref[...], 0.0)                   # bias + ReLU

    # Max over time per conv segment: unrolled 2-D maxima over static
    # H-wide lane slices (everything stays 2-D / lane-dense).
    feats = []
    off = 0
    for l_out in seg_lens:
        m = act[:, off:off + hidden]
        for p in range(1, l_out):
            s = off + p * hidden
            m = jnp.maximum(m, act[:, s:s + hidden])
        feats.append(m)                                         # (tn, H)
        off += l_out * hidden

    bfc = bfc_ref[...]                                          # (1, out_dim)
    if out_dim == 1:
        # FC on the VPU: multiply by the weight row + lane reduce
        # (avoids a (tn,2H)@(2H,1) one-lane MXU matmul and the concat).
        w_row = wfc_ref[...]                                    # (1, n*H)
        acc = feats[0] * w_row[:, 0:hidden]
        for i in range(1, len(feats)):
            acc = acc + feats[i] * w_row[:, i * hidden:(i + 1) * hidden]
        o_ref[...] = jnp.sum(acc, axis=1, keepdims=True) + bfc
    else:
        # General output_dim: split the FC per conv (static wfc slices, no concat).
        o = jnp.dot(feats[0], wfc_ref[0:hidden, :],
                    preferred_element_type=jnp.float32)
        for i in range(1, len(feats)):
            o = o + jnp.dot(feats[i], wfc_ref[i * hidden:(i + 1) * hidden, :],
                            preferred_element_type=jnp.float32)
        o_ref[...] = o + bfc


# ---------------------------------------------------------------------------
# Parameter setup
# ---------------------------------------------------------------------------
def init_params(key, input_dim, hidden_dim, output_dim, kernel_sizes):
    """PyTorch-style init: Conv1d weight (H, k) (in_channels=1 squeezed),
    conv bias (1, H), fc weight stored transposed as (n*H, out), fc bias (1, out)."""
    params = {}
    ks = list(kernel_sizes)
    keys = jax.random.split(key, 2 * len(ks) + 2)
    for i, k in enumerate(ks):
        bound = 1.0 / jnp.sqrt(1.0 * k)
        params[f"w{i}"] = jax.random.uniform(
            keys[2 * i], (hidden_dim, k), jnp.float32, -bound, bound)
        params[f"b{i}"] = jax.random.uniform(
            keys[2 * i + 1], (1, hidden_dim), jnp.float32, -bound, bound)
    fan_in = hidden_dim * len(ks)
    bound = 1.0 / jnp.sqrt(1.0 * fan_in)
    params["wfc"] = jax.random.uniform(
        keys[-2], (fan_in, output_dim), jnp.float32, -bound, bound)
    params["bfc"] = jax.random.uniform(
        keys[-1], (1, output_dim), jnp.float32, -bound, bound)
    return params


def prepare_kernel_params(params, input_dim, kernel_sizes):
    """Fold conv weights into one Toeplitz matrix + one tiled bias row
    (done once, outside the kernel)."""
    hidden = params["w0"].shape[0]
    w_blocks, b_blocks, seg_lens = [], [], []
    for i, k in enumerate(kernel_sizes):
        w = params[f"w{i}"]                      # (H, k)
        b = params[f"b{i}"]                      # (1, H)
        l_out = input_dim - k + 1
        seg_lens.append(l_out)
        cols = []
        for p in range(l_out):
            col = jnp.zeros((input_dim, hidden), jnp.float32)
            col = col.at[p:p + k, :].set(jnp.transpose(w))      # (k, H)
            cols.append(col)
        w_blocks.append(jnp.concatenate(cols, axis=1))          # (L, l_out*H)
        b_blocks.append(jnp.tile(b, (1, l_out)))                # (1, l_out*H)
    out_dim = params["wfc"].shape[1]
    wfc = params["wfc"]                                         # (n*H, out)
    wfc_k = jnp.transpose(wfc) if out_dim == 1 else wfc         # row layout for VPU path
    return {
        "w_toep": jnp.concatenate(w_blocks, axis=1),            # (L, total)
        "b_row": jnp.concatenate(b_blocks, axis=1),             # (1, total)
        "wfc": wfc_k,
        "bfc": params["bfc"],                                   # (1, out)
        "seg_lens": tuple(seg_lens),
        "hidden": hidden,
        "out_dim": out_dim,
    }


# ---------------------------------------------------------------------------
# Forward
# ---------------------------------------------------------------------------
def simple_cnn_forward(x, kparams, *, tile_n=512):
    # TODO(synk): optionally cast x / w_toep to bf16 for the MXU on v6e/v7x
    # (accumulation stays f32); kept f32 here for exact parity with the reference.
    n, seq_len = x.shape
    out_dim = kparams["out_dim"]

    tile_n = min(tile_n, _round_up(n, 8))
    n_pad = _round_up(n, tile_n)
    if n_pad != n:
        x = jnp.pad(x, ((0, n_pad - n), (0, 0)))
    grid = (n_pad // tile_n,)

    kernel = functools.partial(
        _cnn_kernel, seg_lens=kparams["seg_lens"],
        hidden=kparams["hidden"], out_dim=out_dim)

    resident = lambda i: (0, 0)     # weights/biases stay in VMEM across batch tiles
    out = pl.pallas_call(
        kernel,
        out_shape=jax.ShapeDtypeStruct((n_pad, out_dim), jnp.float32),
        grid=grid,
        in_specs=[
            pl.BlockSpec((tile_n, seq_len), lambda i: (i, 0)),
            pl.BlockSpec(kparams["w_toep"].shape, resident),
            pl.BlockSpec(kparams["b_row"].shape, resident),
            pl.BlockSpec(kparams["wfc"].shape, resident),
            pl.BlockSpec(kparams["bfc"].shape, resident),
        ],
        out_specs=pl.BlockSpec((tile_n, out_dim), lambda i: (i, 0)),
        compiler_params=pltpu.CompilerParams(
            dimension_semantics=("parallel",),
            vmem_limit_bytes=32 * 1024 * 1024),
    )(x, kparams["w_toep"], kparams["b_row"], kparams["wfc"], kparams["bfc"])

    out = out[:n]
    return jnp.squeeze(out)          # torch .squeeze()


# ---------------------------------------------------------------------------
# Pure-JAX reference (mirrors the PyTorch forward; independent of the Toeplitz fold)
# ---------------------------------------------------------------------------
def reference_forward(x, params, kernel_sizes=(2, 3)):
    hp = jax.lax.Precision.HIGHEST
    outs = []
    for i, k in enumerate(kernel_sizes):
        w, b = params[f"w{i}"], params[f"b{i}"]
        l_out = x.shape[1] - k + 1
        patches = jnp.stack([x[:, j:j + l_out] for j in range(k)], axis=-1)
        conv = jnp.einsum('nlk,hk->nlh', patches, w, precision=hp) + b[None, :, :]
        outs.append(jnp.max(jax.nn.relu(conv), axis=1))
    feat = jnp.concatenate(outs, axis=1)
    return jnp.squeeze(jnp.dot(feat, params["wfc"], precision=hp) + params["bfc"])


if __name__ == "__main__":
    # Small shapes consistent with the module: batch=4, input_dim (seq len)=16,
    # hidden_dim=32, output_dim=1, kernel_sizes=(2, 3).
    N, L, HIDDEN, OUT = 4, 16, 32, 1
    KS = (2, 3)

    key = jax.random.PRNGKey(0)
    kx, kp = jax.random.split(key)
    x = jax.random.normal(kx, (N, L), dtype=jnp.float32)
    params = init_params(kp, L, HIDDEN, OUT, KS)
    kparams = prepare_kernel_params(params, L, KS)

    y = simple_cnn_forward(x, kparams)
    y = jax.block_until_ready(y)

    y_ref = reference_forward(x, params, KS)
    assert y.shape == (N,), y.shape
    assert jnp.allclose(y, y_ref, atol=1e-4, rtol=1e-4), (y, y_ref)

    print("KERNEL_OK")
</pallas_src>

<mosaic_0001>
module attributes {stable_mosaic.version = 11 : i64} {
  func.func @_cnn_kernel(%arg0: i32, %arg1: memref<8x16xf32, #tpu.memory_space<vmem>>, %arg2: memref<16x928xf32, #tpu.memory_space<vmem>>, %arg3: memref<1x928xf32, #tpu.memory_space<vmem>>, %arg4: memref<1x64xf32, #tpu.memory_space<vmem>>, %arg5: memref<1x1xf32, #tpu.memory_space<vmem>>, %arg6: memref<8x1xf32, #tpu.memory_space<vmem>>) attributes {dimension_semantics = [#tpu.dimension_semantics<parallel>], iteration_bounds = array<i64: 1>, scalar_prefetch = 0 : i64, scratch_operands = 0 : i64, tpu.core_type = #tpu.core_type<tc>, window_params = [{transform_indices = @transform_0, window_bounds = array<i64: 8, 16>}, {pipeline_mode = #tpu.pipeline_mode<synchronous>, transform_indices = @transform_1, window_bounds = array<i64: 16, 928>}, {pipeline_mode = #tpu.pipeline_mode<synchronous>, transform_indices = @transform_2, window_bounds = array<i64: 1, 928>}, {pipeline_mode = #tpu.pipeline_mode<synchronous>, transform_indices = @transform_3, window_bounds = array<i64: 1, 64>}, {pipeline_mode = #tpu.pipeline_mode<synchronous>, transform_indices = @transform_4, window_bounds = array<i64: 1, 1>}, {transform_indices = @transform_5, window_bounds = array<i64: 8, 1>}]} {
    %c0 = arith.constant 0 : index
    %c0_0 = arith.constant 0 : index
    %0 = vector.load %arg1[%c0, %c0_0] : memref<8x16xf32, #tpu.memory_space<vmem>>, vector<8x16xf32>
    %c0_1 = arith.constant 0 : index
    %c0_2 = arith.constant 0 : index
    %1 = vector.load %arg2[%c0_1, %c0_2] : memref<16x928xf32, #tpu.memory_space<vmem>>, vector<16x928xf32>
    %cst = arith.constant dense<0.000000e+00> : vector<8x928xf32>
    %2 = tpu.matmul %0, %1, %cst {dimension_numbers = #tpu.dot_dimension_numbers<[1], [0], [0], [1], [0, 0, 1, 1], [], []>} : vector<8x16xf32>, vector<16x928xf32>, vector<8x928xf32> -> vector<8x928xf32>
    %c0_3 = arith.constant 0 : index
    %c0_4 = arith.constant 0 : index
    %3 = vector.load %arg3[%c0_3, %c0_4] : memref<1x928xf32, #tpu.memory_space<vmem>>, vector<1x928xf32>
    %4 = vector.broadcast %3 : vector<1x928xf32> to vector<8x928xf32>
    %5 = arith.addf %2, %4 : vector<8x928xf32>
    %cst_5 = arith.constant 0.000000e+00 : f32
    %6 = vector.broadcast %cst_5 : f32 to vector<8x928xf32>
    %7 = arith.maximumf %5, %6 : vector<8x928xf32>
    %8 = vector.extract_strided_slice %7 {offsets = [0, 0], sizes = [8, 32], strides = [1, 1]} : vector<8x928xf32> to vector<8x32xf32>
    %9 = vector.extract_strided_slice %7 {offsets = [0, 32], sizes = [8, 32], strides = [1, 1]} : vector<8x928xf32> to vector<8x32xf32>
    %10 = arith.maximumf %8, %9 : vector<8x32xf32>
    %11 = vector.extract_strided_slice %7 {offsets = [0, 64], sizes = [8, 32], strides = [1, 1]} : vector<8x928xf32> to vector<8x32xf32>
    %12 = arith.maximumf %10, %11 : vector<8x32xf32>
    %13 = vector.extract_strided_slice %7 {offsets = [0, 96], sizes = [8, 32], strides = [1, 1]} : vector<8x928xf32> to vector<8x32xf32>
    %14 = arith.maximumf %12, %13 : vector<8x32xf32>
    %15 = vector.extract_strided_slice %7 {offsets = [0, 128], sizes = [8, 32], strides = [1, 1]} : vector<8x928xf32> to vector<8x32xf32>
    %16 = arith.maximumf %14, %15 : vector<8x32xf32>
    %17 = vector.extract_strided_slice %7 {offsets = [0, 160], sizes = [8, 32], strides = [1, 1]} : vector<8x928xf32> to vector<8x32xf32>
    %18 = arith.maximumf %16, %17 : vector<8x32xf32>
    %19 = vector.extract_strided_slice %7 {offsets = [0, 192], sizes = [8, 32], strides = [1, 1]} : vector<8x928xf32> to vector<8x32xf32>
    %20 = arith.maximumf %18, %19 : vector<8x32xf32>
    %21 = vector.extract_strided_slice %7 {offsets = [0, 224], sizes = [8, 32], strides = [1, 1]} : vector<8x928xf32> to vector<8x32xf32>
    %22 = arith.maximumf %20, %21 : vector<8x32xf32>
    %23 = vector.extract_strided_slice %7 {offsets = [0, 256], sizes = [8, 32], strides = [1, 1]} : vector<8x928xf32> to vector<8x32xf32>
    %24 = arith.maximumf %22, %23 : vector<8x32xf32>
    %25 = vector.extract_strided_slice %7 {offsets = [0, 288], sizes = [8, 32], strides = [1, 1]} : vector<8x928xf32> to vector<8x32xf32>
    %26 = arith.maximumf %24, %25 : vector<8x32xf32>
    %27 = vector.extract_strided_slice %7 {offsets = [0, 320], sizes = [8, 32], strides = [1, 1]} : vector<8x928xf32> to vector<8x32xf32>
    %28 = arith.maximumf %26, %27 : vector<8x32xf32>
    %29 = vector.extract_strided_slice %7 {offsets = [0, 352], sizes = [8, 32], strides = [1, 1]} : vector<8x928xf32> to vector<8x32xf32>
    %30 = arith.maximumf %28, %29 : vector<8x32xf32>
    %31 = vector.extract_strided_slice %7 {offsets = [0, 384], sizes = [8, 32], strides = [1, 1]} : vector<8x928xf32> to vector<8x32xf32>
    %32 = arith.maximumf %30, %31 : vector<8x32xf32>
    %33 = vector.extract_strided_slice %7 {offsets = [0, 416], sizes = [8, 32], strides = [1, 1]} : vector<8x928xf32> to vector<8x32xf32>
    %34 = arith.maximumf %32, %33 : vector<8x32xf32>
    %35 = vector.extract_strided_slice %7 {offsets = [0, 448], sizes = [8, 32], strides = [1, 1]} : vector<8x928xf32> to vector<8x32xf32>
    %36 = arith.maximumf %34, %35 : vector<8x32xf32>
    %37 = vector.extract_strided_slice %7 {offsets = [0, 480], sizes = [8, 32], strides = [1, 1]} : vector<8x928xf32> to vector<8x32xf32>
    %38 = vector.extract_strided_slice %7 {offsets = [0, 512], sizes = [8, 32], strides = [1, 1]} : vector<8x928xf32> to vector<8x32xf32>
    %39 = arith.maximumf %37, %38 : vector<8x32xf32>
    %40 = vector.extract_strided_slice %7 {offsets = [0, 544], sizes = [8, 32], strides = [1, 1]} : vector<8x928xf32> to vector<8x32xf32>
    %41 = arith.maximumf %39, %40 : vector<8x32xf32>
    %42 = vector.extract_strided_slice %7 {offsets = [0, 576], sizes = [8, 32], strides = [1, 1]} : vector<8x928xf32> to vector<8x32xf32>
    %43 = arith.maximumf %41, %42 : vector<8x32xf32>
    %44 = vector.extract_strided_slice %7 {offsets = [0, 608], sizes = [8, 32], strides = [1, 1]} : vector<8x928xf32> to vector<8x32xf32>
    %45 = arith.maximumf %43, %44 : vector<8x32xf32>
    %46 = vector.extract_strided_slice %7 {offsets = [0, 640], sizes = [8, 32], strides = [1, 1]} : vector<8x928xf32> to vector<8x32xf32>
    %47 = arith.maximumf %45, %46 : vector<8x32xf32>
    %48 = vector.extract_strided_slice %7 {offsets = [0, 672], sizes = [8, 32], strides = [1, 1]} : vector<8x928xf32> to vector<8x32xf32>
    %49 = arith.maximumf %47, %48 : vector<8x32xf32>
    %50 = vector.extract_strided_slice %7 {offsets = [0, 704], sizes = [8, 32], strides = [1, 1]} : vector<8x928xf32> to vector<8x32xf32>
    %51 = arith.maximumf %49, %50 : vector<8x32xf32>
    %52 = vector.extract_strided_slice %7 {offsets = [0, 736], sizes = [8, 32], strides = [1, 1]} : vector<8x928xf32> to vector<8x32xf32>
    %53 = arith.maximumf %51, %52 : vector<8x32xf32>
    %54 = vector.extract_strided_slice %7 {offsets = [0, 768], sizes = [8, 32], strides = [1, 1]} : vector<8x928xf32> to vector<8x32xf32>
    %55 = arith.maximumf %53, %54 : vector<8x32xf32>
    %56 = vector.extract_strided_slice %7 {offsets = [0, 800], sizes = [8, 32], strides = [1, 1]} : vector<8x928xf32> to vector<8x32xf32>
    %57 = arith.maximumf %55, %56 : vector<8x32xf32>
    %58 = vector.extract_strided_slice %7 {offsets = [0, 832], sizes = [8, 32], strides = [1, 1]} : vector<8x928xf32> to vector<8x32xf32>
    %59 = arith.maximumf %57, %58 : vector<8x32xf32>
    %60 = vector.extract_strided_slice %7 {offsets = [0, 864], sizes = [8, 32], strides = [1, 1]} : vector<8x928xf32> to vector<8x32xf32>
    %61 = arith.maximumf %59, %60 : vector<8x32xf32>
    %62 = vector.extract_strided_slice %7 {offsets = [0, 896], sizes = [8, 32], strides = [1, 1]} : vector<8x928xf32> to vector<8x32xf32>
    %63 = arith.maximumf %61, %62 : vector<8x32xf32>
    %c0_6 = arith.constant 0 : index
    %c0_7 = arith.constant 0 : index
    %64 = vector.load %arg5[%c0_6, %c0_7] : memref<1x1xf32, #tpu.memory_space<vmem>>, vector<1x1xf32>
    %c0_8 = arith.constant 0 : index
    %c0_9 = arith.constant 0 : index
    %65 = vector.load %arg4[%c0_8, %c0_9] : memref<1x64xf32, #tpu.memory_space<vmem>>, vector<1x64xf32>
    %66 = vector.extract_strided_slice %65 {offsets = [0, 0], sizes = [1, 32], strides = [1, 1]} : vector<1x64xf32> to vector<1x32xf32>
    %67 = vector.broadcast %66 : vector<1x32xf32> to vector<8x32xf32>
    %68 = arith.mulf %36, %67 : vector<8x32xf32>
    %69 = vector.extract_strided_slice %65 {offsets = [0, 32], sizes = [1, 32], strides = [1, 1]} : vector<1x64xf32> to vector<1x32xf32>
    %70 = vector.broadcast %69 : vector<1x32xf32> to vector<8x32xf32>
    %71 = arith.mulf %63, %70 : vector<8x32xf32>
    %72 = arith.addf %68, %71 : vector<8x32xf32>
    %cst_10 = arith.constant dense<0.000000e+00> : vector<8xf32>
    %73 = vector.multi_reduction <add>, %72, %cst_10 [1] : vector<8x32xf32> to vector<8xf32>
    %74 = vector.shape_cast %73 : vector<8xf32> to vector<8x1xf32>
    %75 = vector.broadcast %64 : vector<1x1xf32> to vector<8x1xf32>
    %76 = arith.addf %74, %75 : vector<8x1xf32>
    %c0_11 = arith.constant 0 : index
    %c0_12 = arith.constant 0 : index
    %77 = vector.load %arg6[%c0_11, %c0_12] : memref<8x1xf32, #tpu.memory_space<vmem>>, vector<8x1xf32>
    tpu.vector_store %arg6[%c0_11, %c0_12], %76 {strides = array<i32>} : memref<8x1xf32, #tpu.memory_space<vmem>>, vector<8x1xf32>,
    return
  }
  func.func @transform_0(%arg0: i32) -> (i32, i32) {
    %c0_i32 = arith.constant 0 : i32
    %c0_i32_0 = arith.constant 0 : i32
    return %arg0, %c0_i32 : i32, i32
  }
  func.func @transform_1(%arg0: i32) -> (i32, i32) {
    %c0_i32 = arith.constant 0 : i32
    %c0_i32_0 = arith.constant 0 : i32
    %c0_i32_1 = arith.constant 0 : i32
    return %c0_i32, %c0_i32_0 : i32, i32
  }
  func.func @transform_2(%arg0: i32) -> (i32, i32) {
    %c0_i32 = arith.constant 0 : i32
    %c0_i32_0 = arith.constant 0 : i32
    %c0_i32_1 = arith.constant 0 : i32
    return %c0_i32, %c0_i32_0 : i32, i32
  }
  func.func @transform_3(%arg0: i32) -> (i32, i32) {
    %c0_i32 = arith.constant 0 : i32
    %c0_i32_0 = arith.constant 0 : i32
    %c0_i32_1 = arith.constant 0 : i32
    return %c0_i32, %c0_i32_0 : i32, i32
  }
  func.func @transform_4(%arg0: i32) -> (i32, i32) {
    %c0_i32 = arith.constant 0 : i32
    %c0_i32_0 = arith.constant 0 : i32
    %c0_i32_1 = arith.constant 0 : i32
    return %c0_i32, %c0_i32_0 : i32, i32
  }
  func.func @transform_5(%arg0: i32) -> (i32, i32) {
    %c0_i32 = arith.constant 0 : i32
    %c0_i32_0 = arith.constant 0 : i32
    return %arg0, %c0_i32 : i32, i32
  }
}

</mosaic_0001>

<llo_original>
// kernel: tpu_custom_call.1
$region0: #{tpu_custom_call.1}
  #allocation0 [shape = 'u32[]', space=smem, size = 0x4, offset = 0x4, fixed_abs, tag = 'smem constant byte address 0x4 - core index']
  #allocation1 [shape = 'u32[144,128]{1,0:T(1,128)}', space=vmem, size = 0x12000, scoped, tag = 'internal scratch']
  #allocation2 [shape = 'f32[1,1]{1,0:T(1,128)S(1)}', space=vmem, size = 0x200, scoped, tag = 'scoped memory for tpu_custom_call.1']
  %s0 = inlined_call_operand.hbm [shape: f32[8,16], index: 0, kind: input, shape index: {}]
  %s1 = inlined_call_operand.hbm [shape: f32[16,928], index: 1, kind: input, shape index: {}]
  %s2 = inlined_call_operand.vmem [shape: f32[1,928], index: 2, kind: input, shape index: {}]
  %s3 = inlined_call_operand.vmem [shape: f32[1,64], index: 3, kind: input, shape index: {}]
  %s4 = inlined_call_operand.<no memory space> [shape: f32[1,1], index: 4, kind: input, shape index: {}]
  %s5 = inlined_call_operand.vmem [shape: f32[8,1], index: 5, kind: output, shape index: {}]
  %s6 = sld [smem:[#allocation0]]
  $region38: #{tpu_custom_call.1} parent=0
    _
  %s8 = ssub.s32 1, %s6
  %s9 = scalar_select 0, %s8, %s6
  %v10 = vstv %s4
  %11 = vst [vmem:[#allocation2] sm:$0x1] %v10
  $region1: #{tpu_custom_call.1} parent=0
    #allocation3 [shape = 'u8[4096]{0}', space=vmem, size = 0x1000, scoped, tag = 'input window, operand 0, single buffered']
    #allocation4 [shape = 's32[1]{0}', space=sflag, size = 0x4, scoped, tag = 'scoped memory for tpu_custom_call.1']
    #allocation5 [shape = 'u8[65536]{0}', space=vmem, size = 0x10000, scoped, tag = 'input window, operand 1, single buffered']
    #allocation6 [shape = 's32[1]{0}', space=sflag, size = 0x4, scoped, tag = 'scoped memory for tpu_custom_call.1']
    %12 = vsyncpa [#allocation4], 0
    %13 = vsyncpa [#allocation6], 0
    // Predicated region
    $region2: #{tpu_custom_call.1} parent=1 // pred_check
      _
    $region3: #{tpu_custom_call.1} parent=1 // pred_check_branch
      %15 = sbr.rel (0) target = $region5
    $region4: #{tpu_custom_call.1} parent=1 // pred_region
      %s17 = ssub.s32 128, 128
      %18 = vsyncadd [#allocation4], %s17
      %s20 = sshll.u32 [#allocation3], 4
      %s21 = int_to_ptr.vmem [resolvable:$true] %s20
      %23 = dma.hbm_to_vmem [thread:$0]  %s0, 128, %s21, [#allocation4]
    $region5: #{tpu_custom_call.1} parent=1 // pred_fallthru
      _
    // Predicated region
    $region6: #{tpu_custom_call.1} parent=1 // pred_check
      _
    $region7: #{tpu_custom_call.1} parent=1 // pred_check_branch
      %25 = sbr.rel (0) target = $region9
    $region8: #{tpu_custom_call.1} parent=1 // pred_region
      %s27 = ssub.s32 2048, 2048
      %28 = vsyncadd [#allocation6], %s27
      %s29 = sshll.u32 [#allocation5], 4
      %s30 = int_to_ptr.vmem [resolvable:$true] %s29
      %35 = dma.hbm_to_vmem [thread:$0]  %s1, 2048, %s30, [#allocation6], 1024, 1024, 64
    $region9: #{tpu_custom_call.1} parent=1 // pred_fallthru
      _
    // Predicated region
    $region10: #{tpu_custom_call.1} parent=1 // pred_check
      _
    $region11: #{tpu_custom_call.1} parent=1 // pred_check_branch
      %37 = sbr.rel (0) target = $region13
    $region12: #{tpu_custom_call.1} parent=1 // pred_region
      _
    $region13: #{tpu_custom_call.1} parent=1 // pred_fallthru
      _
    // Predicated region
    $region14: #{tpu_custom_call.1} parent=1 // pred_check
      _
    $region15: #{tpu_custom_call.1} parent=1 // pred_check_branch
      %39 = sbr.rel (0) target = $region17
    $region16: #{tpu_custom_call.1} parent=1 // pred_region
      _
    $region17: #{tpu_custom_call.1} parent=1 // pred_fallthru
      _
    // Predicated region
    $region18: #{tpu_custom_call.1} parent=1 // pred_check
      _
    $region19: #{tpu_custom_call.1} parent=1 // pred_check_branch
      %41 = sbr.rel (0) target = $region21
    $region20: #{tpu_custom_call.1} parent=1 // pred_region
      _
    $region21: #{tpu_custom_call.1} parent=1 // pred_fallthru
      _
    // Predicated region
    $region22: #{tpu_custom_call.1} parent=1 // pred_check
      _
    $region23: #{tpu_custom_call.1} parent=1 // pred_check_branch
      %43 = sbr.rel (0) target = $region25
    $region24: #{tpu_custom_call.1} parent=1 // pred_region
      %44 = dma.done [#allocation4], 128
    $region25: #{tpu_custom_call.1} parent=1 // pred_fallthru
      _
    // Predicated region
    $region26: #{tpu_custom_call.1} parent=1 // pred_check
      _
    $region27: #{tpu_custom_call.1} parent=1 // pred_check_branch
      %46 = sbr.rel (0) target = $region29
    $region28: #{tpu_custom_call.1} parent=1 // pred_region
      %47 = dma.done [#allocation6], 2048
    $region29: #{tpu_custom_call.1} parent=1 // pred_fallthru
      _
    %v48 = vld [vmem:[#allocation3] sm:$0xff]
    %v49 = vld [vmem:[#allocation5] sm:$0xff]
    %v50 = vld [vmem:[#allocation5 + $0x8] sm:$0xff]
    %v51 = vld [vmem:[#allocation5 + $0x10] sm:$0xff]
    %v52 = vld [vmem:[#allocation5 + $0x18] sm:$0xff]
    %v53 = vld [vmem:[#allocation5 + $0x20] sm:$0xff]
    %v54 = vld [vmem:[#allocation5 + $0x28] sm:$0xff]
    %v55 = vld [vmem:[#allocation5 + $0x30] sm:$0xff]
    %v56 = vld [vmem:[#allocation5 + $0x38] sm:$0xff]
    %v57 = vld [vmem:[#allocation5 + $0x40] sm:$0xff]
    %v58 = vld [vmem:[#allocation5 + $0x48] sm:$0xff]
    %v59 = vld [vmem:[#allocation5 + $0x50] sm:$0xff]
    %v60 = vld [vmem:[#allocation5 + $0x58] sm:$0xff]
    %v61 = vld [vmem:[#allocation5 + $0x60] sm:$0xff]
    %v62 = vld [vmem:[#allocation5 + $0x68] sm:$0xff]
    %v63 = vld [vmem:[#allocation5 + $0x70] sm:$0xff]
    %v64 = vld [vmem:[#allocation5 + $0x78] sm:$0xff]
    %v65 = vld [vmem:[%s2] sm:$0xff]
    %v67 = vlaneseq
    %v68 = vshrl.u32 %v67, 7
    %v69 = vsub.s32 0, %v68
    %v70 = vrot.slane %v65, %v69
    %v71 = vlaneseq
    %v72 = vshrl.u32 %v71, 7
    %v73 = vsub.s32 1, %v72
    %v74 = vrot.slane %v65, %v73
    %v75 = vlaneseq
    %v76 = vshrl.u32 %v75, 7
    %v77 = vsub.s32 2, %v76
    %v78 = vrot.slane %v65, %v77
    %v79 = vlaneseq
    %v80 = vshrl.u32 %v79, 7
    %v81 = vsub.s32 3, %v80
    %v82 = vrot.slane %v65, %v81
    %v83 = vlaneseq
    %v84 = vshrl.u32 %v83, 7
    %v85 = vsub.s32 4, %v84
    %v86 = vrot.slane %v65, %v85
    %v87 = vlaneseq
    %v88 = vshrl.u32 %v87, 7
    %v89 = vsub.s32 5, %v88
    %v90 = vrot.slane %v65, %v89
    %v91 = vlaneseq
    %v92 = vshrl.u32 %v91, 7
    %v93 = vsub.s32 6, %v92
    %v94 = vrot.slane %v65, %v93
    %v95 = vlaneseq
    %v96 = vshrl.u32 %v95, 7
    %v97 = vsub.s32 7, %v96
    %v98 = vrot.slane %v65, %v97
    %vm107 = vcmask 130048
    %v109 = vsel %vm107, %v48, 0
    %111 = vmatprep.subr.mxu0 %v50
    %112 = vmatpush1.msra.mxu0 %v49
    %113 = vmatprep.subr.mxu0 %v58
    %114 = vmatpush1.msra.mxu0 %v57
    %115 = vmatprep.subr.mxu0 0.0
    %116 = vmatpush1.msra.mxu0 0.0
    %117 = vmatprep.subr.mxu0 0.0
    %118 = vmatpush1.msra.mxu0 0.0
    %119 = vmatprep.subr.mxu0 0.0
    %120 = vmatpush1.msra.mxu0 0.0
    %121 = vmatprep.subr.mxu0 0.0
    %122 = vmatpush1.msra.mxu0 0.0
    %123 = vmatprep.subr.mxu0 0.0
    %124 = vmatpush1.msra.mxu0 0.0
    %125 = vmatprep.subr.mxu0 0.0
    %126 = vmatpush1.msra.mxu0 0.0
    %127 = vmatprep.subr.mxu0 0.0
    %128 = vmatpush1.msra.mxu0 0.0
    %129 = vmatprep.subr.mxu0 0.0
    %130 = vmatpush1.msra.mxu0 0.0
    %131 = vmatprep.subr.mxu0 0.0
    %132 = vmatpush1.msra.mxu0 0.0
    %133 = vmatprep.subr.mxu0 0.0
    %134 = vmatpush1.msra.mxu0 0.0
    %135 = vmatprep.subr.mxu0 0.0
    %136 = vmatpush1.msra.mxu0 0.0
    %137 = vmatprep.subr.mxu0 0.0
    %138 = vmatpush1.msra.mxu0 0.0
    %139 = vmatprep.subr.mxu0 0.0
    %140 = vmatpush1.msra.mxu0 0.0
    %141 = vmatprep.subr.mxu0 0.0
    %142 = vmatpush1.msra.mxu0 0.0
    %143 = vmatprep.subr.mxu0 0.0
    %144 = vmatpush1.msra.mxu0 0.0
    %145 = vmatprep.subr.mxu0 0.0
    %146 = vmatpush1.msra.mxu0 0.0
    %147 = vmatprep.subr.mxu0 0.0
    %148 = vmatpush1.msra.mxu0 0.0
    %149 = vmatprep.subr.mxu0 0.0
    %150 = vmatpush1.msra.mxu0 0.0
    %151 = vmatprep.subr.mxu0 0.0
    %152 = vmatpush1.msra.mxu0 0.0
    %153 = vmatprep.subr.mxu0 0.0
    %154 = vmatpush1.msra.mxu0 0.0
    %155 = vmatprep.subr.mxu0 0.0
    %156 = vmatpush1.msra.mxu0 0.0
    %157 = vmatprep.subr.mxu0 0.0
    %158 = vmatpush1.msra.mxu0 0.0
    %159 = vmatprep.subr.mxu0 0.0
    %160 = vmatpush1.msra.mxu0 0.0
    %161 = vmatprep.subr.mxu0 0.0
    %162 = vmatpush1.msra.mxu0 0.0
    %163 = vmatprep.subr.mxu0 0.0
    %164 = vmatpush1.msra.mxu0 0.0
    %165 = vmatprep.subr.mxu0 0.0
    %166 = vmatpush1.msra.mxu0 0.0
    %167 = vmatprep.subr.mxu0 0.0
    %168 = vmatpush1.msra.mxu0 0.0
    %169 = vmatprep.subr.mxu0 0.0
    %170 = vmatpush1.msra.mxu0 0.0
    %171 = vmatprep.subr.mxu0 0.0
    %172 = vmatpush1.msra.mxu0 0.0
    %173 = vmatprep.subr.mxu0 0.0
    %174 = vmatpush1.msra.mxu0 0.0
    %175 = vmatprep.mubr.f32.mxu0 0.0
    %176 = vmatmul.mubr.f32.gmra.mrb[0].mxu0 %v109
    %v177 = vpop.f32.mrb[0].mxu0
    %v178 = vadd.f32 %v70, %v177
    %v179 = vpop.f32.mrb[0].mxu0
    %v180 = vadd.f32 %v74, %v179
    %181 = vdwg.mxu0
    %182 = vmatprep.subr.mxu0 %v52
    %183 = vmatpush1.msra.mxu0 %v51
    %184 = vmatprep.subr.mxu0 %v60
    %185 = vmatpush1.msra.mxu0 %v59
    %186 = vmatprep.subr.mxu0 0.0
    %187 = vmatpush1.msra.mxu0 0.0
    %188 = vmatprep.subr.mxu0 0.0
    %189 = vmatpush1.msra.mxu0 0.0
    %190 = vmatprep.subr.mxu0 0.0
    %191 = vmatpush1.msra.mxu0 0.0
    %192 = vmatprep.subr.mxu0 0.0
    %193 = vmatpush1.msra.mxu0 0.0
    %194 = vmatprep.subr.mxu0 0.0
    %195 = vmatpush1.msra.mxu0 0.0
    %196 = vmatprep.subr.mxu0 0.0
    %197 = vmatpush1.msra.mxu0 0.0
    %198 = vmatprep.subr.mxu0 0.0
    %199 = vmatpush1.msra.mxu0 0.0
    %200 = vmatprep.subr.mxu0 0.0
    %201 = vmatpush1.msra.mxu0 0.0
    %202 = vmatprep.subr.mxu0 0.0
    %203 = vmatpush1.msra.mxu0 0.0
    %204 = vmatprep.subr.mxu0 0.0
    %205 = vmatpush1.msra.mxu0 0.0
    %206 = vmatprep.subr.mxu0 0.0
    %207 = vmatpush1.msra.mxu0 0.0
    %208 = vmatprep.subr.mxu0 0.0
    %209 = vmatpush1.msra.mxu0 0.0
    %210 = vmatprep.subr.mxu0 0.0
    %211 = vmatpush1.msra.mxu0 0.0
    %212 = vmatprep.subr.mxu0 0.0
    %213 = vmatpush1.msra.mxu0 0.0
    %214 = vmatprep.subr.mxu0 0.0
    %215 = vmatpush1.msra.mxu0 0.0
    %216 = vmatprep.subr.mxu0 0.0
    %217 = vmatpush1.msra.mxu0 0.0
    %218 = vmatprep.subr.mxu0 0.0
    %219 = vmatpush1.msra.mxu0 0.0
    %220 = vmatprep.subr.mxu0 0.0
    %221 = vmatpush1.msra.mxu0 0.0
    %222 = vmatprep.subr.mxu0 0.0
    %223 = vmatpush1.msra.mxu0 0.0
    %224 = vmatprep.subr.mxu0 0.0
    %225 = vmatpush1.msra.mxu0 0.0
    %226 = vmatprep.subr.mxu0 0.0
    %227 = vmatpush1.msra.mxu0 0.0
    %228 = vmatprep.subr.mxu0 0.0
    %229 = vmatpush1.msra.mxu0 0.0
    %230 = vmatprep.subr.mxu0 0.0
    %231 = vmatpush1.msra.mxu0 0.0
    %232 = vmatprep.subr.mxu0 0.0
    %233 = vmatpush1.msra.mxu0 0.0
    %234 = vmatprep.subr.mxu0 0.0
    %235 = vmatpush1.msra.mxu0 0.0
    %236 = vmatprep.subr.mxu0 0.0
    %237 = vmatpush1.msra.mxu0 0.0
    %238 = vmatprep.subr.mxu0 0.0
    %239 = vmatpush1.msra.mxu0 0.0
    %240 = vmatprep.subr.mxu0 0.0
    %241 = vmatpush1.msra.mxu0 0.0
    %242 = vmatprep.subr.mxu0 0.0
    %243 = vmatpush1.msra.mxu0 0.0
    %244 = vmatprep.subr.mxu0 0.0
    %245 = vmatpush1.msra.mxu0 0.0
    %246 = vmatprep.mubr.f32.mxu0 0.0
    %247 = vmatmul.mubr.f32.gmra.mrb[0].mxu0 %v109
    %v248 = vpop.f32.mrb[0].mxu0
    %v249 = vadd.f32 %v78, %v248
    %v250 = vpop.f32.mrb[0].mxu0
    %v251 = vadd.f32 %v82, %v250
    %252 = vdwg.mxu0
    %253 = vmatprep.subr.mxu0 %v54
    %254 = vmatpush1.msra.mxu0 %v53
    %255 = vmatprep.subr.mxu0 %v62
    %256 = vmatpush1.msra.mxu0 %v61
    %257 = vmatprep.subr.mxu0 0.0
    %258 = vmatpush1.msra.mxu0 0.0
    %259 = vmatprep.subr.mxu0 0.0
    %260 = vmatpush1.msra.mxu0 0.0
    %261 = vmatprep.subr.mxu0 0.0
    %262 = vmatpush1.msra.mxu0 0.0
    %263 = vmatprep.subr.mxu0 0.0
    %264 = vmatpush1.msra.mxu0 0.0
    %265 = vmatprep.subr.mxu0 0.0
    %266 = vmatpush1.msra.mxu0 0.0
    %267 = vmatprep.subr.mxu0 0.0
    %268 = vmatpush1.msra.mxu0 0.0
    %269 = vmatprep.subr.mxu0 0.0
    %270 = vmatpush1.msra.mxu0 0.0
    %271 = vmatprep.subr.mxu0 0.0
    %272 = vmatpush1.msra.mxu0 0.0
    %273 = vmatprep.subr.mxu0 0.0
    %274 = vmatpush1.msra.mxu0 0.0
    %275 = vmatprep.subr.mxu0 0.0
    %276 = vmatpush1.msra.mxu0 0.0
    %277 = vmatprep.subr.mxu0 0.0
    %278 = vmatpush1.msra.mxu0 0.0
    %279 = vmatprep.subr.mxu0 0.0
    %280 = vmatpush1.msra.mxu0 0.0
    %281 = vmatprep.subr.mxu0 0.0
    %282 = vmatpush1.msra.mxu0 0.0
    %283 = vmatprep.subr.mxu0 0.0
    %284 = vmatpush1.msra.mxu0 0.0
    %285 = vmatprep.subr.mxu0 0.0
    %286 = vmatpush1.msra.mxu0 0.0
    %287 = vmatprep.subr.mxu0 0.0
    %288 = vmatpush1.msra.mxu0 0.0
    %289 = vmatprep.subr.mxu0 0.0
    %290 = vmatpush1.msra.mxu0 0.0
    %291 = vmatprep.subr.mxu0 0.0
    %292 = vmatpush1.msra.mxu0 0.0
    %293 = vmatprep.subr.mxu0 0.0
    %294 = vmatpush1.msra.mxu0 0.0
    %295 = vmatprep.subr.mxu0 0.0
    %296 = vmatpush1.msra.mxu0 0.0
    %297 = vmatprep.subr.mxu0 0.0
    %298 = vmatpush1.msra.mxu0 0.0
    %299 = vmatprep.subr.mxu0 0.0
    %300 = vmatpush1.msra.mxu0 0.0
    %301 = vmatprep.subr.mxu0 0.0
    %302 = vmatpush1.msra.mxu0 0.0
    %303 = vmatprep.subr.mxu0 0.0
    %304 = vmatpush1.msra.mxu0 0.0
    %305 = vmatprep.subr.mxu0 0.0
    %306 = vmatpush1.msra.mxu0 0.0
    %307 = vmatprep.subr.mxu0 0.0
    %308 = vmatpush1.msra.mxu0 0.0
    %309 = vmatprep.subr.mxu0 0.0
    %310 = vmatpush1.msra.mxu0 0.0
    %311 = vmatprep.subr.mxu0 0.0
    %312 = vmatpush1.msra.mxu0 0.0
    %313 = vmatprep.subr.mxu0 0.0
    %314 = vmatpush1.msra.mxu0 0.0
    %315 = vmatprep.subr.mxu0 0.0
    %316 = vmatpush1.msra.mxu0 0.0
    %317 = vmatprep.mubr.f32.mxu0 0.0
    %318 = vmatmul.mubr.f32.gmra.mrb[0].mxu0 %v109
    %v319 = vpop.f32.mrb[0].mxu0
    %v320 = vadd.f32 %v86, %v319
    %v321 = vpop.f32.mrb[0].mxu0
    %v322 = vadd.f32 %v90, %v321
    %323 = vdwg.mxu0
    %324 = vmatprep.subr.mxu0 %v56
    %325 = vmatpush1.msra.mxu0 %v55
    %326 = vmatprep.subr.mxu0 %v64
    %327 = vmatpush1.msra.mxu0 %v63
    %328 = vmatprep.subr.mxu0 0.0
    %329 = vmatpush1.msra.mxu0 0.0
    %330 = vmatprep.subr.mxu0 0.0
    %331 = vmatpush1.msra.mxu0 0.0
    %332 = vmatprep.subr.mxu0 0.0
    %333 = vmatpush1.msra.mxu0 0.0
    %334 = vmatprep.subr.mxu0 0.0
    %335 = vmatpush1.msra.mxu0 0.0
    %336 = vmatprep.subr.mxu0 0.0
    %337 = vmatpush1.msra.mxu0 0.0
    %338 = vmatprep.subr.mxu0 0.0
    %339 = vmatpush1.msra.mxu0 0.0
    %340 = vmatprep.subr.mxu0 0.0
    %341 = vmatpush1.msra.mxu0 0.0
    %342 = vmatprep.subr.mxu0 0.0
    %343 = vmatpush1.msra.mxu0 0.0
    %344 = vmatprep.subr.mxu0 0.0
    %345 = vmatpush1.msra.mxu0 0.0
    %346 = vmatprep.subr.mxu0 0.0
    %347 = vmatpush1.msra.mxu0 0.0
    %348 = vmatprep.subr.mxu0 0.0
    %349 = vmatpush1.msra.mxu0 0.0
    %350 = vmatprep.subr.mxu0 0.0
    %351 = vmatpush1.msra.mxu0 0.0
    %352 = vmatprep.subr.mxu0 0.0
    %353 = vmatpush1.msra.mxu0 0.0
    %354 = vmatprep.subr.mxu0 0.0
    %355 = vmatpush1.msra.mxu0 0.0
    %356 = vmatprep.subr.mxu0 0.0
    %357 = vmatpush1.msra.mxu0 0.0
    %358 = vmatprep.subr.mxu0 0.0
    %359 = vmatpush1.msra.mxu0 0.0
    %360 = vmatprep.subr.mxu0 0.0
    %361 = vmatpush1.msra.mxu0 0.0
    %362 = vmatprep.subr.mxu0 0.0
    %363 = vmatpush1.msra.mxu0 0.0
    %364 = vmatprep.subr.mxu0 0.0
    %365 = vmatpush1.msra.mxu0 0.0
    %366 = vmatprep.subr.mxu0 0.0
    %367 = vmatpush1.msra.mxu0 0.0
    %368 = vmatprep.subr.mxu0 0.0
    %369 = vmatpush1.msra.mxu0 0.0
    %370 = vmatprep.subr.mxu0 0.0
    %371 = vmatpush1.msra.mxu0 0.0
    %372 = vmatprep.subr.mxu0 0.0
    %373 = vmatpush1.msra.mxu0 0.0
    %374 = vmatprep.subr.mxu0 0.0
    %375 = vmatpush1.msra.mxu0 0.0
    %376 = vmatprep.subr.mxu0 0.0
    %377 = vmatpush1.msra.mxu0 0.0
    %378 = vmatprep.subr.mxu0 0.0
    %379 = vmatpush1.msra.mxu0 0.0
    %380 = vmatprep.subr.mxu0 0.0
    %381 = vmatpush1.msra.mxu0 0.0
    %382 = vmatprep.subr.mxu0 0.0
    %383 = vmatpush1.msra.mxu0 0.0
    %384 = vmatprep.subr.mxu0 0.0
    %385 = vmatpush1.msra.mxu0 0.0
    %386 = vmatprep.subr.mxu0 0.0
    %387 = vmatpush1.msra.mxu0 0.0
    %388 = vmatprep.mubr.f32.mxu0 0.0
    %389 = vmatmul.mubr.f32.gmra.mrb[0].mxu0 %v109
    %v390 = vpop.f32.mrb[0].mxu0
    %v391 = vadd.f32 %v94, %v390
    %v392 = vpop.f32.mrb[0].mxu0
    %v393 = vadd.f32 %v98, %v392
    %394 = vdwg.mxu0
    %v395 = vmax.f32 %v178, 0.0
    %v396 = vmax.f32 %v180, 0.0
    %v397 = vmax.f32 %v249, 0.0
    %v398 = vmax.f32 %v251, 0.0
    %v399 = vmax.f32 %v320, 0.0
    %v400 = vmax.f32 %v322, 0.0
    %v401 = vmax.f32 %v391, 0.0
    %v402 = vmax.f32 %v393, 0.0
    %404 = vrot.lane.b32.xlu0 %v395, 96
    %v405 = vpop.permute.xlu0 %404
    %v407 = vmax.f32 %v395, %v405
    %408 = vrot.lane.b32.xlu0 %v395, 64
    %v409 = vpop.permute.xlu0 %408
    %v411 = vmax.f32 %v407, %v409
    %412 = vrot.lane.b32.xlu0 %v395, 32
    %v413 = vpop.permute.xlu0 %412
    %v415 = vmax.f32 %v411, %v413
    %v416 = vmax.f32 %v415, %v396
    %418 = vrot.lane.b32.xlu0 %v396, 96
    %v419 = vpop.permute.xlu0 %418
    %v421 = vmax.f32 %v416, %v419
    %422 = vrot.lane.b32.xlu0 %v396, 64
    %v423 = vpop.permute.xlu0 %422
    %v425 = vmax.f32 %v421, %v423
    %426 = vrot.lane.b32.xlu0 %v396, 32
    %v427 = vpop.permute.xlu0 %426
    %v429 = vmax.f32 %v425, %v427
    %v430 = vmax.f32 %v429, %v397
    %432 = vrot.lane.b32.xlu0 %v397, 96
    %v433 = vpop.permute.xlu0 %432
    %v435 = vmax.f32 %v430, %v433
    %436 = vrot.lane.b32.xlu0 %v397, 64
    %v437 = vpop.permute.xlu0 %436
    %v439 = vmax.f32 %v435, %v437
    %440 = vrot.lane.b32.xlu0 %v397, 32
    %v441 = vpop.permute.xlu0 %440
    %v443 = vmax.f32 %v439, %v441
    %v444 = vmax.f32 %v443, %v398
    %446 = vrot.lane.b32.xlu0 %v398, 96
    %v447 = vpop.permute.xlu0 %446
    %v449 = vmax.f32 %v444, %v447
    %450 = vrot.lane.b32.xlu0 %v398, 64
    %v451 = vpop.permute.xlu0 %450
    %v453 = vmax.f32 %v449, %v451
    %455 = vrot.lane.b32.xlu0 %v399, 96
    %v456 = vpop.permute.xlu0 %455
    %v458 = vmax.f32 %v398, %v456
    %459 = vrot.lane.b32.xlu0 %v399, 64
    %v460 = vpop.permute.xlu0 %459
    %v462 = vmax.f32 %v458, %v460
    %463 = vrot.lane.b32.xlu0 %v399, 32
    %v464 = vpop.permute.xlu0 %463
    %v466 = vmax.f32 %v462, %v464
    %v467 = vmax.f32 %v466, %v399
    %469 = vrot.lane.b32.xlu0 %v400, 96
    %v470 = vpop.permute.xlu0 %469
    %v472 = vmax.f32 %v467, %v470
    %473 = vrot.lane.b32.xlu0 %v400, 64
    %v474 = vpop.permute.xlu0 %473
    %v476 = vmax.f32 %v472, %v474
    %477 = vrot.lane.b32.xlu0 %v400, 32
    %v478 = vpop.permute.xlu0 %477
    %v480 = vmax.f32 %v476, %v478
    %v481 = vmax.f32 %v480, %v400
    %483 = vrot.lane.b32.xlu0 %v401, 96
    %v484 = vpop.permute.xlu0 %483
    %v486 = vmax.f32 %v481, %v484
    %487 = vrot.lane.b32.xlu0 %v401, 64
    %v488 = vpop.permute.xlu0 %487
    %v490 = vmax.f32 %v486, %v488
    %491 = vrot.lane.b32.xlu0 %v401, 32
    %v492 = vpop.permute.xlu0 %491
    %v494 = vmax.f32 %v490, %v492
    %v495 = vmax.f32 %v494, %v401
    %497 = vrot.lane.b32.xlu0 %v402, 96
    %v498 = vpop.permute.xlu0 %497
    %v500 = vmax.f32 %v495, %v498
    %v501 = vld [vmem:[#allocation2] sm:$0x1]
    %v502 = vld [vmem:[%s3] sm:$0x1]
    %v504 = vlaneseq
    %v505 = vshrl.u32 %v504, 7
    %v506 = vsub.s32 0, %v505
    %v507 = vrot.slane %v502, %v506
    %v509 = vmul.f32 %v453, %v507
    %510 = vrot.lane.b32.xlu0 %v507, 64
    %v511 = vpop.permute.xlu0 %510
    %v513 = vmul.f32 %v500, %v511
    %515 = vrot.lane.b32.xlu0 %v513, 32
    %v516 = vpop.permute.xlu0 %515
    %v518 = vadd.f32 %v509, %v516
    %vm519 = vcmask 261120
    %v520 = vsel %vm519, %v518, 0.0
    %521 = vadd.xlane.f32.xlu0 %v520
    %v522 = vpop.xlane.xlu0 %521
    %v524 = vlaneseq
    %v525 = vshrl.u32 %v524, 7
    %v526 = vsub.s32 0, %v525
    %v527 = vrot.slane %v501, %v526
    %v529 = vadd.f32 %v522, %v527
    %vm530 = vcmask 7168
    %531 = vst.msk [vmem:[%s5] sm:$0xff] %vm530, %v529
    // Predicated region
    $region30: #{tpu_custom_call.1} parent=1 // pred_check
      _
    $region31: #{tpu_custom_call.1} parent=1 // pred_check_branch
      %533 = sbr.rel (0) target = $region33
    $region32: #{tpu_custom_call.1} parent=1 // pred_region
      _
    $region33: #{tpu_custom_call.1} parent=1 // pred_fallthru
      _
    // Predicated region
    $region34: #{tpu_custom_call.1} parent=1 // pred_check
      _
    $region35: #{tpu_custom_call.1} parent=1 // pred_check_branch
      %535 = sbr.rel (0) target = $region37
    $region36: #{tpu_custom_call.1} parent=1 // pred_region
      _
    $region37: #{tpu_custom_call.1} parent=1 // pred_fallthru
      _
    %536 = vsyncpa [#allocation4], 1
    %537 = vsyncpa [#allocation6], 1

</llo_original>
